<compile_context>
chip_gen: v5e
topology: v5e:2x2
jax: 0.10.0
libtpu: 0.0.40
codegen_flags: <defaults>
</compile_context>

<pallas_src>
import jax
import jax.numpy as jnp
from jax.experimental import pallas as pl
from jax.experimental.pallas import tpu as pltpu

LANES = 128          # vreg lane width; last block dim must be 128-dense
MAX_TILE_ROWS = 512  # 512 x 128 x 4 B = 256 KiB per f32 tile (good pipeline depth)


def linreg_kernel(w_ref, b_ref, x_ref, o_ref):
    # w_ref (1,1) and b_ref (1,) live in SMEM; x_ref/o_ref are (tile_rows, 128)
    # lane-dense VMEM tiles. Pure VPU multiply-add; MXU deliberately not used
    # (K=1 contraction would waste the systolic array).
    w = w_ref[0, 0]
    b = b_ref[0]
    o_ref[...] = x_ref[...] * w + b


def linear_regression_forward(x, weight, bias):
    """x: (N, 1) f32, weight: (1, 1) f32, bias: (1,) f32 -> (N, 1) f32."""
    n = x.shape[0]
    x_flat = x.reshape(-1)

    # Lane-dense view: pad N up to a whole number of 128-lane rows.
    rows = pl.cdiv(n, LANES)

    if rows > MAX_TILE_ROWS:
        # Tiled path: tile_rows (512) is a multiple of 8, satisfying the (8, 128)
        # block divisibility rule; pad rows to a whole number of tiles.
        tile_rows = MAX_TILE_ROWS
        padded_rows = pl.cdiv(rows, tile_rows) * tile_rows
    else:
        # Small input: one block equal to the full (rows, 128) array
        # (block == full dims is always legal regardless of (8, 128)).
        tile_rows = rows
        padded_rows = rows

    padded_n = padded_rows * LANES
    x_pad = jnp.pad(x_flat, (0, padded_n - n))
    x2d = x_pad.reshape(padded_rows, LANES)

    grid = (padded_rows // tile_rows,)

    out2d = pl.pallas_call(
        linreg_kernel,
        out_shape=jax.ShapeDtypeStruct((padded_rows, LANES), x.dtype),
        grid=grid,
        in_specs=[
            pl.BlockSpec(memory_space=pltpu.SMEM),            # weight (1, 1)
            pl.BlockSpec(memory_space=pltpu.SMEM),            # bias (1,)
            pl.BlockSpec((tile_rows, LANES), lambda i: (i, 0)),  # x tile
        ],
        out_specs=pl.BlockSpec((tile_rows, LANES), lambda i: (i, 0)),
        compiler_params=pltpu.CompilerParams(
            # Row tiles are independent -> shard across TCs on v7x megacore.
            dimension_semantics=("parallel",),
            # 4 buffers in flight (2x in, 2x out) at 256 KiB each -> well under
            # this cap; cap itself is safe on v5e/v6e (128 MiB) and v7x (64 MiB).
            vmem_limit_bytes=32 * 1024 * 1024,
        ),
    )(weight, bias, x2d)

    # Strip the lane/tile padding and restore PyTorch's (N, 1) output shape.
    return out2d.reshape(-1)[:n].reshape(n, 1)


if __name__ == "__main__":
    key = jax.random.PRNGKey(0)
    kx, kw, kb, kx2 = jax.random.split(key, 4)

    # Deterministic parameters, PyTorch Linear(1, 1) shapes: W (1, 1), b (1,).
    weight = jax.random.uniform(kw, (1, 1), dtype=jnp.float32, minval=-1.0, maxval=1.0)
    bias = jax.random.uniform(kb, (1,), dtype=jnp.float32, minval=-1.0, maxval=1.0)

    # Small batch consistent with Linear(1, 1). (For N this tiny, plain XLA
    # x*w+b would beat any kernel launch; we still route through Pallas to
    # exercise the kernel.)
    N_small = 8
    x_small = jax.random.normal(kx, (N_small, 1), dtype=jnp.float32)
    y_small = jax.block_until_ready(linear_regression_forward(x_small, weight, bias))
    y_small_ref = x_small @ weight.T + bias
    assert y_small.shape == (N_small, 1)
    assert jnp.allclose(y_small, y_small_ref, atol=1e-6), "mismatch vs reference (small)"

    # Larger batch that exercises the tiled, multi-grid-step, padded path.
    N_big = 70_000  # rows = 547 -> padded to 1024 rows, grid = (2,)
    x_big = jax.random.normal(kx2, (N_big, 1), dtype=jnp.float32)
    y_big = jax.block_until_ready(linear_regression_forward(x_big, weight, bias))
    y_big_ref = x_big @ weight.T + bias
    assert y_big.shape == (N_big, 1)
    assert jnp.allclose(y_big, y_big_ref, atol=1e-6), "mismatch vs reference (big)"

    print("KERNEL_OK")
</pallas_src>

<mosaic_0001>
module attributes {stable_mosaic.version = 11 : i64} {
  func.func @linreg_kernel(%arg0: i32, %arg1: memref<1x1xf32, #tpu.memory_space<smem>>, %arg2: memref<1xf32, #tpu.memory_space<smem>>, %arg3: memref<1x128xf32, #tpu.memory_space<vmem>>, %arg4: memref<1x128xf32, #tpu.memory_space<vmem>>) attributes {dimension_semantics = [#tpu.dimension_semantics<parallel>], iteration_bounds = array<i64: 1>, scalar_prefetch = 0 : i64, scratch_operands = 0 : i64, tpu.core_type = #tpu.core_type<tc>, window_params = [{transform_indices = @transform_0, window_bounds = array<i64: 1, 1>}, {transform_indices = @transform_1, window_bounds = array<i64: 1>}, {transform_indices = @transform_2, window_bounds = array<i64: 1, 128>}, {transform_indices = @transform_3, window_bounds = array<i64: 1, 128>}]} {
    %c0 = arith.constant 0 : index
    %c0_0 = arith.constant 0 : index
    %0 = memref.load %arg1[%c0, %c0_0] : memref<1x1xf32, #tpu.memory_space<smem>>
    %c0_1 = arith.constant 0 : index
    %1 = memref.load %arg2[%c0_1] : memref<1xf32, #tpu.memory_space<smem>>
    %c0_2 = arith.constant 0 : index
    %c0_3 = arith.constant 0 : index
    %2 = vector.load %arg3[%c0_2, %c0_3] : memref<1x128xf32, #tpu.memory_space<vmem>>, vector<1x128xf32>
    %3 = vector.broadcast %0 : f32 to vector<1x128xf32>
    %4 = arith.mulf %2, %3 : vector<1x128xf32>
    %5 = vector.broadcast %1 : f32 to vector<1x128xf32>
    %6 = arith.addf %4, %5 : vector<1x128xf32>
    %c0_4 = arith.constant 0 : index
    %c0_5 = arith.constant 0 : index
    %7 = vector.load %arg4[%c0_4, %c0_5] : memref<1x128xf32, #tpu.memory_space<vmem>>, vector<1x128xf32>
    tpu.vector_store %arg4[%c0_4, %c0_5], %6 {strides = array<i32>} : memref<1x128xf32, #tpu.memory_space<vmem>>, vector<1x128xf32>,
    return
  }
  func.func @transform_0(%arg0: i32) -> (i32, i32) {
    %c0_i32 = arith.constant 0 : i32
    %c0_i32_0 = arith.constant 0 : i32
    %c0_i32_1 = arith.constant 0 : i32
    return %c0_i32, %c0_i32_0 : i32, i32
  }
  func.func @transform_1(%arg0: i32) -> i32 {
    %c0_i32 = arith.constant 0 : i32
    %c0_i32_0 = arith.constant 0 : i32
    return %c0_i32 : i32
  }
  func.func @transform_2(%arg0: i32) -> (i32, i32) {
    %c0_i32 = arith.constant 0 : i32
    %c0_i32_0 = arith.constant 0 : i32
    return %arg0, %c0_i32 : i32, i32
  }
  func.func @transform_3(%arg0: i32) -> (i32, i32) {
    %c0_i32 = arith.constant 0 : i32
    %c0_i32_0 = arith.constant 0 : i32
    return %arg0, %c0_i32 : i32, i32
  }
}

</mosaic_0001>

<llo_original>
// kernel: tpu_custom_call.1
$region0: #{tpu_custom_call.1}
  #allocation0 [shape = 'u32[]', space=smem, size = 0x4, offset = 0x4, fixed_abs, tag = 'smem constant byte address 0x4 - core index']
  #allocation1 [shape = 'u32[72,128]{1,0:T(1,128)}', space=vmem, size = 0x9000, scoped, tag = 'internal scratch']
  #allocation2 [shape = 'f32[1,1]{1,0:T(1,128)S(6)}', space=smem, size = 0x200, scoped, tag = 'scoped memory for tpu_custom_call.1']
  #allocation3 [shape = 'f32[1]{0:T(128)S(6)}', space=smem, size = 0x200, scoped, tag = 'scoped memory for tpu_custom_call.1']
  %s0 = inlined_call_operand.<no memory space> [shape: f32[1,1], index: 0, kind: input, shape index: {}]
  %s1 = inlined_call_operand.<no memory space> [shape: f32[1], index: 1, kind: input, shape index: {}]
  %s2 = inlined_call_operand.vmem [shape: f32[1,128], index: 2, kind: input, shape index: {}]
  %s3 = inlined_call_operand.hbm [shape: f32[1,128], index: 3, kind: output, shape index: {}]
  %s4 = sld [smem:[#allocation0]]
  $region22: #{tpu_custom_call.1} parent=0
    _
  %s6 = ssub.s32 1, %s4
  %s7 = scalar_select 0, %s6, %s4
  %8 = sst [smem:[#allocation2]] %s0
  %9 = sst [smem:[#allocation3]] %s1
  $region1: #{tpu_custom_call.1} parent=0
    #allocation4 [shape = 'u8[512]{0}', space=vmem, size = 0x400, scoped, tag = 'output window, operand 0, single buffered']
    #allocation5 [shape = 's32[1]{0}', space=sflag, size = 0x4, scoped, tag = 'scoped memory for tpu_custom_call.1']
    %10 = vsyncpa [#allocation5], 0
    // Predicated region
    $region2: #{tpu_custom_call.1} parent=1 // pred_check
      _
    $region3: #{tpu_custom_call.1} parent=1 // pred_check_branch
      %12 = sbr.rel (0) target = $region5
    $region4: #{tpu_custom_call.1} parent=1 // pred_region
      _
    $region5: #{tpu_custom_call.1} parent=1 // pred_fallthru
      _
    // Predicated region
    $region6: #{tpu_custom_call.1} parent=1 // pred_check
      _
    $region7: #{tpu_custom_call.1} parent=1 // pred_check_branch
      %14 = sbr.rel (0) target = $region9
    $region8: #{tpu_custom_call.1} parent=1 // pred_region
      _
    $region9: #{tpu_custom_call.1} parent=1 // pred_fallthru
      _
    // Predicated region
    $region10: #{tpu_custom_call.1} parent=1 // pred_check
      _
    $region11: #{tpu_custom_call.1} parent=1 // pred_check_branch
      %16 = sbr.rel (0) target = $region13
    $region12: #{tpu_custom_call.1} parent=1 // pred_region
      _
    $region13: #{tpu_custom_call.1} parent=1 // pred_fallthru
      _
    %s17 = sld [smem:[#allocation2]]
    %s18 = sld [smem:[#allocation3]]
    %v19 = vld [vmem:[%s2] sm:$0x1]
    %v20 = vstv %s17
    %v21 = vmul.f32 %v19, %v20
    %v22 = vstv %s18
    %v23 = vadd.f32 %v21, %v22
    %24 = vst [vmem:[#allocation4] sm:$0x1] %v23
    // Predicated region
    $region14: #{tpu_custom_call.1} parent=1 // pred_check
      _
    $region15: #{tpu_custom_call.1} parent=1 // pred_check_branch
      %26 = sbr.rel (0) target = $region17
    $region16: #{tpu_custom_call.1} parent=1 // pred_region
      %28 = vsyncadd [#allocation5], 0
      %s30 = sshll.u32 [#allocation4], 4
      %s31 = int_to_ptr.vmem [resolvable:$true] %s30
      %s32 = sshll.u32 %s3, 4
      %s33 = int_to_ptr.hbm [resolvable:$true] %s32
      %35 = dma.vmem_to_hbm [thread:$0]  %s31, 16, %s33, [#allocation5]
    $region17: #{tpu_custom_call.1} parent=1 // pred_fallthru
      _
    // Predicated region
    $region18: #{tpu_custom_call.1} parent=1 // pred_check
      _
    $region19: #{tpu_custom_call.1} parent=1 // pred_check_branch
      %37 = sbr.rel (0) target = $region21
    $region20: #{tpu_custom_call.1} parent=1 // pred_region
      %39 = dma.done [#allocation5], 16
    $region21: #{tpu_custom_call.1} parent=1 // pred_fallthru
      _
    %40 = vsyncpa [#allocation5], 1

</llo_original>
